<compile_context>
chip_gen: v7x
topology: tpu7x:2x2x1
jax: 0.10.0
libtpu: 0.0.40
codegen_flags: <defaults>
</compile_context>

<pallas_src>
import math

import jax
import jax.numpy as jnp
from jax.experimental import pallas as pl
from jax.experimental.pallas import tpu as pltpu


# ---------------------------------------------------------------------------
# Kernel
# ---------------------------------------------------------------------------
def _add_pe_kernel(x_ref, pe_ref, o_ref):
    # x_ref, pe_ref, o_ref all share the same block shape.
    o_ref[...] = x_ref[...] + pe_ref[...]


# ---------------------------------------------------------------------------
# PE buffer construction (module init time — plain JAX, like register_buffer)
# ---------------------------------------------------------------------------
def make_positional_encoding(block_size: int, n_embd: int, dtype=jnp.float32):
    """Sinusoidal PE table of shape (block_size, n_embd).

    Kept in fp32 by default (like the PyTorch buffer); pass dtype=x.dtype to
    pre-cast once at init and avoid a per-forward cast.
    """
    # Same implicit assumption as the PyTorch module (0::2 / 1::2 interleave).
    assert n_embd % 2 == 0, "n_embd must be even (same assumption as the PyTorch module)"
    position = jnp.arange(block_size, dtype=jnp.float32)[:, None]            # (block_size, 1)
    div_term = jnp.exp(
        jnp.arange(0, n_embd, 2, dtype=jnp.float32)
        * (-(math.log(10000.0) / n_embd))
    )                                                                        # (n_embd//2,)
    angles = position * div_term                                             # (block_size, n_embd//2)
    pe = jnp.zeros((block_size, n_embd), jnp.float32)
    pe = pe.at[:, 0::2].set(jnp.sin(angles))
    pe = pe.at[:, 1::2].set(jnp.cos(angles))
    return pe.astype(dtype)


# ---------------------------------------------------------------------------
# Generation-gated VMEM budget
# ---------------------------------------------------------------------------
def _vmem_budget():
    """(per-block byte budget, vmem_limit_bytes) gated by physical VMEM size."""
    block_budget = 4 * 1024 * 1024      # safe default (v7x: 64 MiB physical VMEM)
    vmem_limit = 32 * 1024 * 1024
    try:
        cap = pltpu.get_tpu_info().vmem_capacity_bytes
        if cap is not None and cap >= 128 * 1024 * 1024:   # v5e / v6e
            block_budget = 8 * 1024 * 1024
            vmem_limit = 64 * 1024 * 1024
    except Exception:
        pass  # not on TPU / info unavailable -> keep conservative defaults
    return block_budget, vmem_limit


# ---------------------------------------------------------------------------
# Tile selection
# ---------------------------------------------------------------------------
def _choose_tile_rows(B, T, D, dtype, block_budget_bytes):
    """Rows per block for the (B*T, D) view.

    Returns a multiple of the sublane pack that divides T and whose
    lane-PADDED block footprint fits the per-block budget, or None if T is
    not a sublane-pack multiple (caller uses the per-batch fallback).
    """
    itemsize = jnp.dtype(dtype).itemsize
    sub = {1: 32, 2: 16}.get(itemsize, 8)
    if T % sub != 0:
        return None

    row_bytes = pl.cdiv(D, 128) * 128 * itemsize           # lane-padded row
    cap_rows = max(sub, ((block_budget_bytes // row_bytes) // sub) * sub)

    def largest_divisor_rows(limit):
        # largest rows with sub | rows, rows | T, rows <= limit  (0 if none)
        best = 0
        m = T // sub
        i = 1
        while i * i <= m:
            if m % i == 0:
                for k in (i, m // i):
                    rows = sub * k
                    if rows <= limit and rows > best:
                        best = rows
            i += 1
        return best

    rows = largest_divisor_rows(cap_rows) or sub

    # v7x megacore: make sure the parallel grid has >= 2 blocks to shard.
    if B * (T // rows) < 2 and rows > sub:
        alt = largest_divisor_rows(rows - 1)
        if alt:
            rows = alt
    return rows


# ---------------------------------------------------------------------------
# Forward
# ---------------------------------------------------------------------------
def positional_encoding_forward(x, pe):
    """x: (B, T, D); pe: (block_size, D) table with block_size >= T."""
    B, T, D = x.shape
    assert pe.shape[0] >= T, "sequence length exceeds block_size"
    assert pe.shape[1] == D, "embedding dim mismatch"
    if pe.dtype != x.dtype:
        # Matches the in-kernel add dtype to x; pre-cast at init to skip this.
        pe = pe.astype(x.dtype)

    block_budget, vmem_limit = _vmem_budget()
    tile_rows = _choose_tile_rows(B, T, D, x.dtype, block_budget)

    if tile_rows is not None:
        # ---- Main path: (B*T, D) row view, sublane-dense blocks -------------
        x2 = x.reshape(B * T, D)        # contiguous collapse: no data movement
        nt = T // tile_rows

        def x_map(t, b):
            return (b * nt + t, 0)

        def pe_map(t, b):               # independent of b -> VMEM-resident
            return (t, 0)

        out2 = pl.pallas_call(
            _add_pe_kernel,
            out_shape=jax.ShapeDtypeStruct((B * T, D), x.dtype),
            grid_spec=pltpu.PrefetchScalarGridSpec(
                num_scalar_prefetch=0,
                grid=(nt, B),           # position tiles OUTER, batch INNER
                in_specs=[
                    pl.BlockSpec((tile_rows, D), x_map),   # x
                    pl.BlockSpec((tile_rows, D), pe_map),  # pe (windows first T rows)
                ],
                out_specs=pl.BlockSpec((tile_rows, D), x_map),
            ),
            compiler_params=pltpu.CompilerParams(
                dimension_semantics=("parallel", "parallel"),
                vmem_limit_bytes=vmem_limit,
            ),
            input_output_aliases={0: 0},   # donate x to reuse its buffer
        )(x2, pe)
        return out2.reshape(B, T, D)

    # ---- Fallback (T not a sublane-pack multiple): per-batch (T, D) slab ----
    # Block dims equal the full (T, D) extents, so any T / D compiles; still
    # pipelined and megacore-shardable across the batch axis.
    pe_b = pe[:T].reshape(1, T, D)      # tiny (T*D-element) wrapper slice
    out = pl.pallas_call(
        _add_pe_kernel,
        out_shape=jax.ShapeDtypeStruct((B, T, D), x.dtype),
        grid_spec=pltpu.PrefetchScalarGridSpec(
            num_scalar_prefetch=0,
            grid=(B,),
            in_specs=[
                pl.BlockSpec((1, T, D), lambda b: (b, 0, 0)),   # x
                pl.BlockSpec((1, T, D), lambda b: (0, 0, 0)),   # pe (resident)
            ],
            out_specs=pl.BlockSpec((1, T, D), lambda b: (b, 0, 0)),
        ),
        compiler_params=pltpu.CompilerParams(
            dimension_semantics=("parallel",),
            vmem_limit_bytes=vmem_limit,
        ),
        input_output_aliases={0: 0},
    )(x, pe_b)
    return out


# ---------------------------------------------------------------------------
# Demo / correctness check
# ---------------------------------------------------------------------------
if __name__ == "__main__":
    # Small config consistent with the module: block_size >= seq, n_embd = hidden.
    batch = 2
    seq = 8
    block_size = 16   # args.block_size
    n_embd = 32       # args.n_embd

    key = jax.random.PRNGKey(0)
    x = jax.random.normal(key, (batch, seq, n_embd), dtype=jnp.float32)

    pe = make_positional_encoding(block_size, n_embd, dtype=x.dtype)

    # Reference of the PyTorch forward in pure JAX (computed before the
    # kernel so the aliased-input path cannot interfere with the check).
    ref = jax.block_until_ready(x + pe[None, :seq, :])

    out = positional_encoding_forward(x, pe)
    out = jax.block_until_ready(out)

    assert out.shape == x.shape
    assert jnp.allclose(out, ref, atol=1e-6), "mismatch vs reference"

    # Also exercise the fallback path (T not a sublane multiple, odd-ish D).
    x_odd = jax.random.normal(jax.random.PRNGKey(1), (3, 5, 20), dtype=jnp.float32)
    pe_odd = make_positional_encoding(7, 20, dtype=x_odd.dtype)
    ref_odd = jax.block_until_ready(x_odd + pe_odd[None, :5, :])
    out_odd = jax.block_until_ready(positional_encoding_forward(x_odd, pe_odd))
    assert jnp.allclose(out_odd, ref_odd, atol=1e-6), "mismatch vs reference (fallback)"

    print("KERNEL_OK")
</pallas_src>

<mosaic_0001>
module attributes {stable_mosaic.version = 11 : i64} {
  func.func @_add_pe_kernel(%arg0: i32, %arg1: i32, %arg2: memref<8x32xf32, #tpu.memory_space<vmem>>, %arg3: memref<8x32xf32, #tpu.memory_space<vmem>>, %arg4: memref<8x32xf32, #tpu.memory_space<vmem>>) attributes {dimension_semantics = [#tpu.dimension_semantics<parallel>, #tpu.dimension_semantics<parallel>], iteration_bounds = array<i64: 1, 2>, scalar_prefetch = 0 : i64, scratch_operands = 0 : i64, tpu.core_type = #tpu.core_type<tc>, window_params = [{transform_indices = @transform_0, window_bounds = array<i64: 8, 32>}, {transform_indices = @transform_1, window_bounds = array<i64: 8, 32>}, {transform_indices = @transform_2, window_bounds = array<i64: 8, 32>}]} {
    %c0 = arith.constant 0 : index
    %c0_0 = arith.constant 0 : index
    %0 = vector.load %arg2[%c0, %c0_0] : memref<8x32xf32, #tpu.memory_space<vmem>>, vector<8x32xf32>
    %c0_1 = arith.constant 0 : index
    %c0_2 = arith.constant 0 : index
    %1 = vector.load %arg3[%c0_1, %c0_2] : memref<8x32xf32, #tpu.memory_space<vmem>>, vector<8x32xf32>
    %2 = arith.addf %0, %1 : vector<8x32xf32>
    %c0_3 = arith.constant 0 : index
    %c0_4 = arith.constant 0 : index
    %3 = vector.load %arg4[%c0_3, %c0_4] : memref<8x32xf32, #tpu.memory_space<vmem>>, vector<8x32xf32>
    tpu.vector_store %arg4[%c0_3, %c0_4], %2 {strides = array<i32>} : memref<8x32xf32, #tpu.memory_space<vmem>>, vector<8x32xf32>,
    return
  }
  func.func @transform_0(%arg0: i32, %arg1: i32) -> (i32, i32) {
    %c1_i32 = arith.constant 1 : i32
    %0 = arith.muli %arg1, %c1_i32 : i32
    %1 = arith.addi %0, %arg0 : i32
    %c0_i32 = arith.constant 0 : i32
    %c0_i32_0 = arith.constant 0 : i32
    return %1, %c0_i32 : i32, i32
  }
  func.func @transform_1(%arg0: i32, %arg1: i32) -> (i32, i32) {
    %c0_i32 = arith.constant 0 : i32
    %c0_i32_0 = arith.constant 0 : i32
    return %arg0, %c0_i32 : i32, i32
  }
  func.func @transform_2(%arg0: i32, %arg1: i32) -> (i32, i32) {
    %c1_i32 = arith.constant 1 : i32
    %0 = arith.muli %arg1, %c1_i32 : i32
    %1 = arith.addi %0, %arg0 : i32
    %c0_i32 = arith.constant 0 : i32
    %c0_i32_0 = arith.constant 0 : i32
    return %1, %c0_i32 : i32, i32
  }
}

</mosaic_0001>

<llo_original>
// kernel: tpu_custom_call.1
$region0: #{tpu_custom_call.1}
  #allocation0 [shape = 'u32[]', space=smem, size = 0x4, offset = 0x4, fixed_abs, tag = 'smem constant byte address 0x4 - core index']
  #allocation1 [shape = 'u32[144,128]{1,0:T(1,128)}', space=vmem, size = 0x12000, scoped, tag = 'internal scratch']
  %s0 = inlined_call_operand.hbm [shape: f32[16,32], index: 0, kind: input, shape index: {}, may-alias: {0,2}]
  %s1 = inlined_call_operand.vmem [shape: f32[16,32], index: 1, kind: input, shape index: {}]
  %s2 = inlined_call_operand.hbm [shape: f32[16,32], index: 2, kind: output, shape index: {}, may-alias: {0,2}]
  %s3 = sld [smem:[#allocation0]]
  $region45: #{tpu_custom_call.1} parent=0
    _
  %s5 = ssub.s32 1, %s3
  %s6 = scalar_select 0, %s5, %s3
  $region1: #{tpu_custom_call.1} parent=0
    #allocation2 [shape = 'u8[8192]{0}', space=vmem, size = 0x2000, scoped, tag = 'input window, operand 0']
    #allocation3 [shape = 's32[2]{0}', space=sflag, size = 0x8, scoped, tag = 'scoped memory for tpu_custom_call.1']
    #allocation4 [shape = 's32[2]{0}', space=sflag, size = 0x8, scoped, tag = 'scoped memory for tpu_custom_call.1']
    #allocation5 [shape = 'u8[8192]{0}', space=vmem, size = 0x2000, scoped, tag = 'output window, operand 0']
    %7 = vsyncpa [#allocation3], 0
    %s8 = scalar_lea.sflag [#allocation3], 1
    %9 = vsyncpa %s8, 0
    %10 = vsyncpa [#allocation4], 0
    %s11 = scalar_lea.sflag [#allocation4], 1
    %12 = vsyncpa %s11, 0
    loop: start=0, step=1, limit=4
    $region2: #{tpu_custom_call.1} parent=1 // loop_pre_header
      _
    $region3: #{tpu_custom_call.1} parent=1 // loop_header
      %s14 = sphi 0, %s18
      %p15 = scmp.ge.s32.totalorder %s14, 4
      %s21 = sphi 0, %s33
      %s22 = sphi 0, %s29
      %s23 = sphi 0, %s21
      %s24 = sphi 0, %s22
      %s25 = sphi 0, %s23
      %s26 = sphi 0, %s24
      %s38 = sphi 0, %s40
      %s41 = sphi 0, %s38
      %s42 = sphi 0, %s41
      %s58 = sphi 0, %s42
      %s64 = sphi 0, %s66
      %s67 = sphi 0, %s64
      %s68 = sphi 0, %s67
      %s84 = sphi 0, %s68
      %s92 = sphi 0, %s94
      %s95 = sphi 0, %s92
      %s96 = sphi 0, %s95
      %s112 = sphi 0, %s96
    $region4: #{tpu_custom_call.1} parent=1 // loop_header_branch
      %17 = sbr.rel (%p15) target = $region8
    $region5: #{tpu_custom_call.1} parent=1 // loop_body
      %s19 = ssub.s32 %s14, 1
      %s20 = ssub.s32 %s14, 2
      %s27 = sadd.s32 1, %s22
      %p28 = scmp.ge.s32.totalorder %s27, 2
      %s29 = scalar_select %p28, 0, %s27
      %s30 = sadd.s32 1, %s21
      %s31 = scalar_select %p28, %s30, %s21
      %p32 = scmp.ge.s32.totalorder %s31, 1
      %s33 = scalar_select %p32, 0, %s31
      %s34 = sadd.s32 %s22, %s21
      %s35 = sadd.s32 %s29, %s33
      %s36 = ssub.s32 %s34, %s35
      %p37 = scmp.eq.s32.totalorder %s36, 0
      %s39 = sadd.s32 %s38, 1
      %s40 = scalar_select %p37, %s38, %s39
      %p43 = pneg %p37
      %p44 = scmp.eq.s32.totalorder %s14, 1
      %p45 = por %p43, %p44
      %p46 = scmp.ne.s32.totalorder %s38, %s41
      %p47 = scmp.eq.s32.totalorder %s14, 0
      %p48 = por %p46, %p47
      %p49 = scmp.ne.s32.totalorder %s38, %s41
      %p50 = scmp.eq.s32.totalorder %s19, 1
      %p51 = por %p49, %p50
      %p52 = scmp.ne.s32.totalorder %s41, %s42
      %p53 = scmp.eq.s32.totalorder %s19, 0
      %p54 = por %p52, %p53
      %p55 = scmp.ne.s32.totalorder %s41, %s42
      %p56 = scmp.eq.s32.totalorder %s20, 1
      %p57 = por %p55, %p56
      %p59 = scmp.ne.s32.totalorder %s42, %s58
      %p60 = scmp.eq.s32.totalorder %s20, 0
      %p61 = por %p59, %p60
      %s62 = ssub.s32 %s21, %s33
      %p63 = scmp.eq.s32.totalorder %s62, 0
      %s65 = sadd.s32 %s64, 1
      %s66 = scalar_select %p63, %s64, %s65
      %p69 = pneg %p63
      %p70 = scmp.eq.s32.totalorder %s14, 1
      %p71 = por %p69, %p70
      %p72 = scmp.ne.s32.totalorder %s64, %s67
      %p73 = scmp.eq.s32.totalorder %s14, 0
      %p74 = por %p72, %p73
      %p75 = scmp.ne.s32.totalorder %s64, %s67
      %p76 = scmp.eq.s32.totalorder %s19, 1
      %p77 = por %p75, %p76
      %p78 = scmp.ne.s32.totalorder %s67, %s68
      %p79 = scmp.eq.s32.totalorder %s19, 0
      %p80 = por %p78, %p79
      %p81 = scmp.ne.s32.totalorder %s67, %s68
      %p82 = scmp.eq.s32.totalorder %s20, 1
      %p83 = por %p81, %p82
      %p85 = scmp.ne.s32.totalorder %s68, %s84
      %p86 = scmp.eq.s32.totalorder %s20, 0
      %p87 = por %p85, %p86
      %s88 = sadd.s32 %s22, %s21
      %s89 = sadd.s32 %s29, %s33
      %s90 = ssub.s32 %s88, %s89
      %p91 = scmp.eq.s32.totalorder %s90, 0
      %s93 = sadd.s32 %s92, 1
      %s94 = scalar_select %p91, %s92, %s93
      %p97 = pneg %p91
      %p98 = scmp.eq.s32.totalorder %s14, 1
      %p99 = por %p97, %p98
      %p100 = scmp.ne.s32.totalorder %s92, %s95
      %p101 = scmp.eq.s32.totalorder %s14, 0
      %p102 = por %p100, %p101
      %p103 = scmp.ne.s32.totalorder %s92, %s95
      %p104 = scmp.eq.s32.totalorder %s19, 1
      %p105 = por %p103, %p104
      %p106 = scmp.ne.s32.totalorder %s95, %s96
      %p107 = scmp.eq.s32.totalorder %s19, 0
      %p108 = por %p106, %p107
      %p109 = scmp.ne.s32.totalorder %s95, %s96
      %p110 = scmp.eq.s32.totalorder %s20, 1
      %p111 = por %p109, %p110
      %p113 = scmp.ne.s32.totalorder %s96, %s112
      %p114 = scmp.eq.s32.totalorder %s20, 0
      %p115 = por %p113, %p114
      %p116 = scmp.le.s32.totalorder 1, %s14
      %p117 = scmp.lt.s32.totalorder %s14, 3
      %p118 = pnand %p116, %p117
      %p119 = pneg %p118
      // Predicated region
      $region9: #{tpu_custom_call.1} parent=5 // pred_check
        _
      $region10: #{tpu_custom_call.1} parent=5 // pred_check_branch
        %121 = sbr.rel (%p118) target = $region12
      $region11: #{tpu_custom_call.1} parent=5 // pred_region
        %s122 = ssub.s32 %s14, 1
        // Predicated region
        $region13: #{tpu_custom_call.1} parent=11 // pred_check
          %p123 = pneg %p80
        $region14: #{tpu_custom_call.1} parent=11 // pred_check_branch
          %125 = sbr.rel (%p123) target = $region16
        $region15: #{tpu_custom_call.1} parent=11 // pred_region
          %p126 = scmp.lt.s32.totalorder %s23, 1
          %s127 = scalar_select %p126, %s23, 1
          %s128 = smul.addr %s127, 8
          %s129 = scalar_lea.vmem %s1, %s128
        $region16: #{tpu_custom_call.1} parent=11 // pred_fallthru
          _
      $region12: #{tpu_custom_call.1} parent=5 // pred_fallthru
        _
      %p130 = scmp.lt.s32.totalorder %s14, 2
      // Predicated region
      $region17: #{tpu_custom_call.1} parent=5 // pred_check
        %p131 = pneg %p130
      $region18: #{tpu_custom_call.1} parent=5 // pred_check_branch
        %133 = sbr.rel (%p131) target = $region20
      $region19: #{tpu_custom_call.1} parent=5 // pred_region
        // Predicated region
        $region21: #{tpu_custom_call.1} parent=19 // pred_check
          %p134 = pneg %p48
        $region22: #{tpu_custom_call.1} parent=19 // pred_check_branch
          %136 = sbr.rel (%p134) target = $region24
        $region23: #{tpu_custom_call.1} parent=19 // pred_region
          %s137 = sand.u32 %s38, 1
          %s138 = scalar_lea.sflag [#allocation3], %s137
          %s139 = sand.u32 %s38, 1
          %s140 = smul.addr %s139, 8
          %s141 = scalar_lea.vmem [#allocation2], %s140
          %s142 = sadd.s32 %s22, %s21
          %s144 = ssub.s32 128, 128
          %145 = vsyncadd %s138, %s144
          %s146 = smul.addr %s142, 128
          %s147 = scalar_lea.hbm %s0, %s146
          %s149 = sshll.u32 %s141, 4
          %s150 = int_to_ptr.vmem [resolvable:$true] %s149
          %152 = dma.hbm_to_vmem [thread:$0]  %s147, 128, %s150, %s138
        $region24: #{tpu_custom_call.1} parent=19 // pred_fallthru
          _
      $region20: #{tpu_custom_call.1} parent=5 // pred_fallthru
        _
      %p153 = scmp.le.s32.totalorder 1, %s14
      %p154 = scmp.lt.s32.totalorder %s14, 3
      %p155 = pnand %p153, %p154
      %p156 = pneg %p155
      // Predicated region
      $region25: #{tpu_custom_call.1} parent=5 // pred_check
        _
      $region26: #{tpu_custom_call.1} parent=5 // pred_check_branch
        %158 = sbr.rel (%p155) target = $region28
      $region27: #{tpu_custom_call.1} parent=5 // pred_region
        %s159 = ssub.s32 %s14, 1
        %s160 = sand.u32 %s41, 1
        %s161 = scalar_lea.sflag [#allocation3], %s160
        %s162 = sand.u32 %s41, 1
        %s163 = smul.addr %s162, 8
        %s164 = scalar_lea.vmem [#allocation2], %s163
        // Predicated region
        $region29: #{tpu_custom_call.1} parent=27 // pred_check
          %p165 = pneg %p54
        $region30: #{tpu_custom_call.1} parent=27 // pred_check_branch
          %167 = sbr.rel (%p165) target = $region32
        $region31: #{tpu_custom_call.1} parent=27 // pred_region
          %168 = dma.done %s161, 128
        $region32: #{tpu_custom_call.1} parent=27 // pred_fallthru
          _
        %s169 = sand.u32 %s41, 1
        %s170 = scalar_lea.sflag [#allocation3], %s169
        %s171 = sand.u32 %s41, 1
        %s172 = smul.addr %s171, 8
        %s173 = scalar_lea.vmem [#allocation2], %s172
        %p174 = pneg %p54
        %p175 = pneg %p51
        %p176 = scmp.lt.s32.totalorder %s23, 1
        %s177 = scalar_select %p176, %s23, 1
        %s178 = smul.addr %s177, 8
        %s179 = scalar_lea.vmem %s1, %s178
        %p180 = pneg %p80
        %p181 = pneg %p77
        %p182 = pneg %p108
        %p183 = pneg %p105
        %s184 = sand.u32 %s95, 1
        %s185 = scalar_lea.sflag [#allocation4], %s184
        %s186 = sand.u32 %s95, 1
        %s187 = smul.addr %s186, 8
        %s188 = scalar_lea.vmem [#allocation5], %s187
        %s189 = sadd.s32 %s24, %s23
        %p190 = scmp.lt.s32.totalorder %s23, 1
        %s191 = scalar_select %p190, %s23, 1
        %s192 = smul.addr %s191, 8
        %s193 = scalar_lea.vmem %s1, %s192
        %s194 = sadd.s32 %s24, %s23
        %v195 = vld [vmem:[%s164] sm:$0xff]
        %v196 = vld [vmem:[%s193] sm:$0xff]
        %v197 = vadd.f32 %v195, %v196
        %vm198 = vcmask 261120
        %199 = vst.msk [vmem:[%s188] sm:$0xff] %vm198, %v197
        %s200 = sand.u32 %s95, 1
        %s201 = scalar_lea.sflag [#allocation4], %s200
        %s202 = sand.u32 %s95, 1
        %s203 = smul.addr %s202, 8
        %s204 = scalar_lea.vmem [#allocation5], %s203
        // Predicated region
        $region33: #{tpu_custom_call.1} parent=27 // pred_check
          %p205 = pneg %p105
        $region34: #{tpu_custom_call.1} parent=27 // pred_check_branch
          %207 = sbr.rel (%p205) target = $region36
        $region35: #{tpu_custom_call.1} parent=27 // pred_region
          %s208 = sadd.s32 %s24, %s23
          %s210 = ssub.s32 128, 128
          %211 = vsyncadd %s201, %s210
          %s212 = smul.addr %s208, 128
          %s213 = scalar_lea.hbm %s2, %s212
          %s215 = sshll.u32 %s204, 4
          %s216 = int_to_ptr.vmem [resolvable:$true] %s215
          %218 = dma.vmem_to_hbm [thread:$0]  %s216, 128, %s213, %s201
        $region36: #{tpu_custom_call.1} parent=27 // pred_fallthru
          _
      $region28: #{tpu_custom_call.1} parent=5 // pred_fallthru
        _
      %p219 = scmp.le.s32.totalorder 2, %s14
      // Predicated region
      $region37: #{tpu_custom_call.1} parent=5 // pred_check
        %p220 = pneg %p219
      $region38: #{tpu_custom_call.1} parent=5 // pred_check_branch
        %222 = sbr.rel (%p220) target = $region40
      $region39: #{tpu_custom_call.1} parent=5 // pred_region
        %s223 = ssub.s32 %s14, 2
        // Predicated region
        $region41: #{tpu_custom_call.1} parent=39 // pred_check
          %p224 = pneg %p111
        $region42: #{tpu_custom_call.1} parent=39 // pred_check_branch
          %226 = sbr.rel (%p224) target = $region44
        $region43: #{tpu_custom_call.1} parent=39 // pred_region
          %s227 = sand.u32 %s96, 1
          %s228 = scalar_lea.sflag [#allocation4], %s227
          %s229 = sand.u32 %s96, 1
          %s230 = smul.addr %s229, 8
          %s231 = scalar_lea.vmem [#allocation5], %s230
          %232 = dma.done %s228, 128
        $region44: #{tpu_custom_call.1} parent=39 // pred_fallthru
          _
      $region40: #{tpu_custom_call.1} parent=5 // pred_fallthru
        _
    $region6: #{tpu_custom_call.1} parent=1 // loop_footer
      %s18 = sadd.s32 1, %s14
    $region7: #{tpu_custom_call.1} parent=1 // loop_footer_branch
      %13 = sbr.rel target = $region3
    $region8: #{tpu_custom_call.1} parent=1 // loop_exit
      _
    %233 = vsyncpa [#allocation3], 1
    %s234 = scalar_lea.sflag [#allocation3], 1
    %235 = vsyncpa %s234, 1
    %236 = vsyncpa [#allocation4], 1
    %s237 = scalar_lea.sflag [#allocation4], 1
    %238 = vsyncpa %s237, 1

</llo_original>
